<compile_context>
chip_gen: v5e
topology: v5e:2x2
jax: 0.10.0
libtpu: 0.0.40
codegen_flags: <defaults>
</compile_context>

<pallas_src>
import functools

import jax
import jax.numpy as jnp
from jax.experimental import pallas as pl
from jax.experimental.pallas import tpu as pltpu

_LANES = 128
_SUBLANES = 8


# ----------------------------- Pallas kernel -------------------------------

def _sse_kernel(x_ref, y_ref, o_ref, *, tile_rows, inner_rows,
                tiles_per_partial, total_rows, need_mask):
    """Accumulate sum-of-squared-error partials into a resident (8,128) block.

    grid = (num_partials, tiles_per_partial); the output block depends only on
    the leading (parallel) axis, so it stays resident in VMEM across the inner
    (arbitrary) reduction axis.
    """
    p = pl.program_id(0)
    i = pl.program_id(1)
    steps = tile_rows // inner_rows

    @pl.when(i == 0)
    def _():
        o_ref[...] = jnp.zeros_like(o_ref)

    def chunk_sse(s, masked):
        # Strip-mine the (tile_rows, 128) block into 1024-row chunks so Mosaic
        # keeps f32 temporaries small even for multi-MiB DMA blocks.
        r0 = pl.multiple_of(s * inner_rows, inner_rows)
        xs = x_ref[pl.ds(r0, inner_rows), :].astype(jnp.float32)
        ys = y_ref[pl.ds(r0, inner_rows), :].astype(jnp.float32)
        d = xs - ys
        sq = d * d
        if masked:
            # Mask rows past the real extent (partial last block and/or
            # clamped grid-overrun blocks on the parallel axis).
            tile_idx = p * tiles_per_partial + i
            row0 = tile_idx * tile_rows + s * inner_rows
            row_ids = row0 + jax.lax.broadcasted_iota(
                jnp.int32, (inner_rows, _LANES), 0)
            sq = jnp.where(row_ids < total_rows, sq, 0.0)
        # Sublane-group partial reduce: pure VPU adds into one (8,128) vreg.
        return sq.reshape(inner_rows // _SUBLANES, _SUBLANES, _LANES).sum(axis=0)

    def fast_body(s, acc):
        return acc + chunk_sse(s, masked=False)

    def masked_body(s, acc):
        return acc + chunk_sse(s, masked=True)

    if need_mask:
        tile_idx = p * tiles_per_partial + i
        is_boundary = (tile_idx + 1) * tile_rows > total_rows

        # Only the boundary / overrun tile pays iota+cmp+select (VPU); all
        # interior tiles stay on the 3-op/element fast path (HBM-bound).
        @pl.when(is_boundary)
        def _():
            acc = jax.lax.fori_loop(
                0, steps, masked_body,
                jnp.zeros((_SUBLANES, _LANES), jnp.float32))
            o_ref[...] += acc

        @pl.when(jnp.logical_not(is_boundary))
        def _():
            acc = jax.lax.fori_loop(
                0, steps, fast_body,
                jnp.zeros((_SUBLANES, _LANES), jnp.float32))
            o_ref[...] += acc
    else:
        acc = jax.lax.fori_loop(
            0, steps, fast_body,
            jnp.zeros((_SUBLANES, _LANES), jnp.float32))
        o_ref[...] += acc


def _default_num_partials() -> int:
    """2 partials only on 2-TensorCore chips (v7x); 1 elsewhere.

    On 1-TC chips a >1 "parallel" axis is just serial per-step overhead for a
    mem-bound reduction.
    """
    try:
        kind = jax.devices()[0].device_kind.lower()
    except Exception:  # pragma: no cover - defensive
        return 1
    return 2 if "7" in kind else 1


def _mse_pallas(pred: jax.Array, target: jax.Array,
                *, block_bytes_target: int = 4 * 1024 * 1024,
                num_partials: int | None = None) -> jax.Array:
    """Mean squared error via a tiled, pipelined Pallas reduction kernel."""
    assert pred.shape == target.shape
    n = pred.size
    lanes = _LANES
    sublanes = _SUBLANES

    x = pred.reshape(-1)
    y = target.reshape(-1)
    # Pad only to a lane multiple (128); rows % 8 and rows % tile_rows
    # raggedness is handled by the in-kernel boundary mask.  Also guarantee at
    # least 8 rows so one (8,128)-aligned block always fits inside the array.
    padded_n = max(pl.cdiv(n, lanes) * lanes, sublanes * lanes)
    pad = padded_n - n
    if pad:
        # TODO(synk): lane-unaligned tails (n % 128 != 0) pay one HBM pad copy;
        # any 128-aligned size skips this path entirely.
        x = jnp.pad(x, (0, pad))
        y = jnp.pad(y, (0, pad))
    rows = padded_n // lanes
    x2d = x.reshape(rows, lanes)
    y2d = y.reshape(rows, lanes)

    itemsize = jnp.dtype(pred.dtype).itemsize
    # ~4 MiB per input block (8192 rows f32 / 16384 rows bf16): 2 inputs x
    # 2 bufs = 16 MiB, under the explicit 32 MiB vmem limit on every gen.
    cap = max(sublanes, (block_bytes_target // (lanes * itemsize))
              // sublanes * sublanes)
    rows_floor = (rows // sublanes) * sublanes        # >= 8 by construction
    tile_rows = min(cap, rows_floor)
    inner_rows = min(tile_rows, 1024)                 # strip-mine chunk
    tile_rows = (tile_rows // inner_rows) * inner_rows

    total_tiles = pl.cdiv(rows, tile_rows)
    if num_partials is None:
        num_partials = _default_num_partials()
    n_part = min(num_partials, total_tiles)           # shard across TCs on v7x
    tiles_per_partial = pl.cdiv(total_tiles, n_part)
    need_mask = (total_tiles * tile_rows != rows) or \
                (n_part * tiles_per_partial != total_tiles)

    kernel = functools.partial(
        _sse_kernel,
        tile_rows=tile_rows,
        inner_rows=inner_rows,
        tiles_per_partial=tiles_per_partial,
        total_rows=rows,
        need_mask=need_mask,
    )

    # Clamp block index so grid-overrun steps on the parallel axis read an
    # in-bounds block (their contribution is masked to zero in-kernel).
    def in_map(p, i):
        return (jnp.minimum(p * tiles_per_partial + i, total_tiles - 1), 0)

    partials = pl.pallas_call(
        kernel,
        out_shape=jax.ShapeDtypeStruct((n_part * sublanes, lanes), jnp.float32),
        grid=(n_part, tiles_per_partial),
        in_specs=[
            pl.BlockSpec((tile_rows, lanes), in_map),
            pl.BlockSpec((tile_rows, lanes), in_map),
        ],
        out_specs=pl.BlockSpec((sublanes, lanes), lambda p, i: (p, 0)),
        compiler_params=pltpu.CompilerParams(
            dimension_semantics=("parallel", "arbitrary"),
            vmem_limit_bytes=32 * 1024 * 1024),
        cost_estimate=pl.CostEstimate(
            flops=3 * n,
            transcendentals=0,
            bytes_accessed=2 * padded_n * itemsize
                           + n_part * sublanes * lanes * 4),
    )(x2d, y2d)

    # Single tiny cross-lane/sublane reduce over (n_part*8, 128) partials,
    # fused into the same jit.
    return jnp.sum(partials) / jnp.float32(n)


_mse_pallas_jit = jax.jit(_mse_pallas)


# ------------------------ Metric hook pipeline ------------------------------

class PallasMetric:
    """Mirror of pytorch_lightning Metric's hook call-order with identity
    defaults and a Pallas-backed concrete forward (MSE)."""

    def __init__(self, name: str):
        self.name = name

    # --- hooks (defaults are identity, matching the reference) ---
    @staticmethod
    def input_convert(data):
        return data

    @staticmethod
    def output_convert(data, output):
        return output

    @staticmethod
    def ddp_sync(data, output):
        return output

    @staticmethod
    def aggregate(data, output):
        return output

    @staticmethod
    def compute(data, output):
        return output

    # --- concrete forward: hot path runs in the Pallas kernel ---
    def forward(self, pred, target):
        return _mse_pallas_jit(pred, target)

    # --- __call__ reproduces the registered-hook ordering ---
    def __call__(self, *args):
        data = self.input_convert(args)
        output = self.forward(*data)
        output = self.output_convert(data, output)
        output = self.ddp_sync(data, output)
        output = self.aggregate(data, output)
        output = self.compute(data, output)
        return output


# --------------------------------- main -------------------------------------

if __name__ == "__main__":
    key = jax.random.PRNGKey(0)
    k1, k2, k3, k4 = jax.random.split(key, 4)

    # NCHW inputs, small shapes (n = 2*4*16*16 = 2048, lane-aligned -> no
    # wrapper-side padding, reshape is free).
    pred = jax.random.normal(k1, (2, 4, 16, 16), dtype=jnp.float32)
    target = jax.random.normal(k2, (2, 4, 16, 16), dtype=jnp.float32)

    metric = PallasMetric(name="mse")
    out = jax.block_until_ready(metric(pred, target))
    ref = jnp.mean((pred - target) ** 2)
    assert jnp.allclose(out, ref, rtol=1e-5, atol=1e-6), (out, ref)

    # Ragged, lane-unaligned bf16 case exercises the pad + masked boundary path.
    p2 = jax.random.normal(k3, (3, 5, 7, 13), dtype=jnp.bfloat16)
    t2 = jax.random.normal(k4, (3, 5, 7, 13), dtype=jnp.bfloat16)
    out2 = jax.block_until_ready(metric(p2, t2))
    ref2 = jnp.mean((p2.astype(jnp.float32) - t2.astype(jnp.float32)) ** 2)
    assert jnp.allclose(out2, ref2, rtol=1e-4, atol=1e-5), (out2, ref2)

    print("KERNEL_OK")
</pallas_src>

<mosaic_0001>
module attributes {stable_mosaic.version = 11 : i64} {
  func.func @_sse_kernel(%arg0: i32, %arg1: i32, %arg2: memref<16x128xf32, #tpu.memory_space<vmem>>, %arg3: memref<16x128xf32, #tpu.memory_space<vmem>>, %arg4: memref<8x128xf32, #tpu.memory_space<vmem>>) attributes {dimension_semantics = [#tpu.dimension_semantics<parallel>, #tpu.dimension_semantics<arbitrary>], iteration_bounds = array<i64: 1, 1>, scalar_prefetch = 0 : i64, scratch_operands = 0 : i64, tpu.core_type = #tpu.core_type<tc>, window_params = [{transform_indices = @transform_0, window_bounds = array<i64: 16, 128>}, {transform_indices = @transform_1, window_bounds = array<i64: 16, 128>}, {transform_indices = @transform_2, window_bounds = array<i64: 8, 128>}]} {
    %c0_i32 = arith.constant 0 : i32
    %0 = arith.cmpi eq, %arg1, %c0_i32 : i32
    %1 = arith.extui %0 : i1 to i32
    %c0_i32_0 = arith.constant 0 : i32
    %2 = arith.cmpi ne, %1, %c0_i32_0 : i32
    scf.if %2 {
      %cst_8 = arith.constant 0.000000e+00 : f32
      %18 = vector.broadcast %cst_8 : f32 to vector<8x128xf32>
      %c0_9 = arith.constant 0 : index
      %c0_10 = arith.constant 0 : index
      %19 = vector.load %arg4[%c0_9, %c0_10] : memref<8x128xf32, #tpu.memory_space<vmem>>, vector<8x128xf32>
      tpu.vector_store %arg4[%c0_9, %c0_10], %18 {strides = array<i32>} : memref<8x128xf32, #tpu.memory_space<vmem>>, vector<8x128xf32>,
    } else {
    }
    %cst = arith.constant 0.000000e+00 : f32
    %3 = vector.broadcast %cst : f32 to vector<8x128xf32>
    %c0_i32_1 = arith.constant 0 : i32
    %c16_i32 = arith.constant 16 : i32
    %4 = arith.muli %c0_i32_1, %c16_i32 : i32
    %5 = tpu.assume_multiple %4, 16 : i32
    %6 = arith.index_cast %5 : i32 to index
    %c0 = arith.constant 0 : index
    %7 = vector.load %arg2[%6, %c0] : memref<16x128xf32, #tpu.memory_space<vmem>>, vector<16x128xf32>
    %8 = arith.index_cast %5 : i32 to index
    %c0_2 = arith.constant 0 : index
    %9 = vector.load %arg3[%8, %c0_2] : memref<16x128xf32, #tpu.memory_space<vmem>>, vector<16x128xf32>
    %10 = arith.subf %7, %9 : vector<16x128xf32>
    %11 = arith.mulf %10, %10 : vector<16x128xf32>
    %12 = vector.shape_cast %11 : vector<16x128xf32> to vector<2x8x128xf32>
    %cst_3 = arith.constant dense<0.000000e+00> : vector<8x128xf32>
    %13 = vector.multi_reduction <add>, %12, %cst_3 [0] : vector<2x8x128xf32> to vector<8x128xf32>
    %14 = arith.addf %3, %13 : vector<8x128xf32>
    %c1_i32 = arith.constant 1 : i32
    %c0_4 = arith.constant 0 : index
    %c0_5 = arith.constant 0 : index
    %15 = vector.load %arg4[%c0_4, %c0_5] : memref<8x128xf32, #tpu.memory_space<vmem>>, vector<8x128xf32>
    %16 = arith.addf %15, %14 : vector<8x128xf32>
    %c0_6 = arith.constant 0 : index
    %c0_7 = arith.constant 0 : index
    %17 = vector.load %arg4[%c0_6, %c0_7] : memref<8x128xf32, #tpu.memory_space<vmem>>, vector<8x128xf32>
    tpu.vector_store %arg4[%c0_6, %c0_7], %16 {strides = array<i32>} : memref<8x128xf32, #tpu.memory_space<vmem>>, vector<8x128xf32>,
    return
  }
  func.func @transform_0(%arg0: i32, %arg1: i32) -> (i32, i32) {
    %c1_i32 = arith.constant 1 : i32
    %0 = arith.muli %arg0, %c1_i32 : i32
    %1 = arith.addi %0, %arg1 : i32
    %c0_i32 = arith.constant 0 : i32
    %2 = arith.minsi %1, %c0_i32 : i32
    %c0_i32_0 = arith.constant 0 : i32
    %c0_i32_1 = arith.constant 0 : i32
    return %2, %c0_i32_0 : i32, i32
  }
  func.func @transform_1(%arg0: i32, %arg1: i32) -> (i32, i32) {
    %c1_i32 = arith.constant 1 : i32
    %0 = arith.muli %arg0, %c1_i32 : i32
    %1 = arith.addi %0, %arg1 : i32
    %c0_i32 = arith.constant 0 : i32
    %2 = arith.minsi %1, %c0_i32 : i32
    %c0_i32_0 = arith.constant 0 : i32
    %c0_i32_1 = arith.constant 0 : i32
    return %2, %c0_i32_0 : i32, i32
  }
  func.func @transform_2(%arg0: i32, %arg1: i32) -> (i32, i32) {
    %c0_i32 = arith.constant 0 : i32
    %c0_i32_0 = arith.constant 0 : i32
    return %arg0, %c0_i32 : i32, i32
  }
}

</mosaic_0001>

<llo_original>
// kernel: _mse_pallas.1
$region0: #{_mse_pallas.1}
  #allocation0 [shape = 'u32[]', space=smem, size = 0x4, offset = 0x4, fixed_abs, tag = 'smem constant byte address 0x4 - core index']
  #allocation1 [shape = 'u32[72,128]{1,0:T(1,128)}', space=vmem, size = 0x9000, scoped, tag = 'internal scratch']
  %s0 = inlined_call_operand.vmem [shape: f32[16,128], index: 0, kind: input, shape index: {}]
  %s1 = inlined_call_operand.vmem [shape: f32[16,128], index: 1, kind: input, shape index: {}]
  %s2 = inlined_call_operand.vmem [shape: f32[8,128], index: 2, kind: output, shape index: {}]
  %s3 = sld [smem:[#allocation0]]
  $region22: #{_mse_pallas.1} parent=0
    _
  %s5 = ssub.s32 1, %s3
  %s6 = scalar_select 0, %s5, %s3
  // Predicated region
  $region2: #{_mse_pallas.1} parent=0 // pred_check
    _
  $region3: #{_mse_pallas.1} parent=0 // pred_check_branch
    %8 = sbr.rel (0) target = $region5
  $region4: #{_mse_pallas.1} parent=0 // pred_region
    %s9 = sadd.s32 0, 0
    %p10 = scmp.lt.s32.totalorder %s9, 0
    %s11 = scalar_select %p10, %s9, 0
    %s12 = smul.u32 2, %s11
    %p13 = scmp.lt.s32.totalorder %s12, 1
    %s14 = scalar_select %p13, %s12, 1
    %s15 = smul.addr %s14, 8
    %s16 = scalar_lea.vmem %s0, %s15
    %s17 = sadd.s32 0, 0
    %p18 = scmp.lt.s32.totalorder %s17, 0
    %s19 = scalar_select %p18, %s17, 0
    %s20 = smul.u32 2, %s19
  $region5: #{_mse_pallas.1} parent=0 // pred_fallthru
    _
  // Predicated region
  $region6: #{_mse_pallas.1} parent=0 // pred_check
    _
  $region7: #{_mse_pallas.1} parent=0 // pred_check_branch
    %22 = sbr.rel (0) target = $region9
  $region8: #{_mse_pallas.1} parent=0 // pred_region
    %s23 = sadd.s32 0, 0
    %p24 = scmp.lt.s32.totalorder %s23, 0
    %s25 = scalar_select %p24, %s23, 0
    %s26 = smul.u32 2, %s25
    %p27 = scmp.lt.s32.totalorder %s26, 1
    %s28 = scalar_select %p27, %s26, 1
    %s29 = smul.addr %s28, 8
    %s30 = scalar_lea.vmem %s1, %s29
    %s31 = sadd.s32 0, 0
    %p32 = scmp.lt.s32.totalorder %s31, 0
    %s33 = scalar_select %p32, %s31, 0
    %s34 = smul.u32 2, %s33
  $region9: #{_mse_pallas.1} parent=0 // pred_fallthru
    _
  %s35 = sadd.s32 0, 0
  %p36 = scmp.lt.s32.totalorder %s35, 0
  %s37 = scalar_select %p36, %s35, 0
  %s38 = smul.u32 2, %s37
  %p39 = scmp.lt.s32.totalorder %s38, 1
  %s40 = scalar_select %p39, %s38, 1
  %s41 = smul.addr %s40, 8
  %s42 = scalar_lea.vmem %s0, %s41
  %s43 = sadd.s32 0, 0
  %p44 = scmp.lt.s32.totalorder %s43, 0
  %s45 = scalar_select %p44, %s43, 0
  %s46 = smul.u32 2, %s45
  %p47 = scmp.lt.s32.totalorder %s46, 1
  %s48 = scalar_select %p47, %s46, 1
  %s49 = smul.addr %s48, 8
  %s50 = scalar_lea.vmem %s1, %s49
  %s51 = sadd.s32 0, 0
  %p52 = scmp.lt.s32.totalorder %s51, 0
  %s53 = scalar_select %p52, %s51, 0
  %s54 = smul.u32 2, %s53
  %p55 = scmp.lt.s32.totalorder %s54, 1
  %s56 = scalar_select %p55, %s54, 1
  %s57 = smul.addr %s56, 8
  %s58 = scalar_lea.vmem %s0, %s57
  %s59 = sadd.s32 0, 0
  %p60 = scmp.lt.s32.totalorder %s59, 0
  %s61 = scalar_select %p60, %s59, 0
  %s62 = smul.u32 2, %s61
  %s63 = sadd.s32 0, 0
  %p64 = scmp.lt.s32.totalorder %s63, 0
  %s65 = scalar_select %p64, %s63, 0
  %s66 = smul.u32 2, %s65
  %p67 = scmp.lt.s32.totalorder %s66, 1
  %s68 = scalar_select %p67, %s66, 1
  %s69 = smul.addr %s68, 8
  %s70 = scalar_lea.vmem %s1, %s69
  %s71 = sadd.s32 0, 0
  %p72 = scmp.lt.s32.totalorder %s71, 0
  %s73 = scalar_select %p72, %s71, 0
  %s74 = smul.u32 2, %s73
  %p75 = scmp.eq.s32.totalorder 0, 0
  // Predicated region
  $region10: #{_mse_pallas.1} parent=0 // pred_check
    %p76 = pneg %p75
  $region11: #{_mse_pallas.1} parent=0 // pred_check_branch
    %78 = sbr.rel (%p76) target = $region13
  $region12: #{_mse_pallas.1} parent=0 // pred_region
    %79 = vst [vmem:[%s2] sm:$0xff] 0.0
  $region13: #{_mse_pallas.1} parent=0 // pred_fallthru
    _
  %v80 = vld [vmem:[%s58] sm:$0xff]
  %v81 = vld [vmem:[%s58 + $0x8] sm:$0xff]
  %v82 = vld [vmem:[%s70] sm:$0xff]
  %v83 = vld [vmem:[%s70 + $0x8] sm:$0xff]
  %v84 = vsub.f32 %v80, %v82
  %v85 = vsub.f32 %v81, %v83
  %v86 = vmul.f32 %v84, %v84
  %v87 = vmul.f32 %v85, %v85
  %v88 = vadd.f32 %v86, %v87
  %v89 = vadd.f32 %v88, 0.0
  %v90 = vld [vmem:[%s2] sm:$0xff]
  %v91 = vadd.f32 %v90, %v89
  %92 = vst [vmem:[%s2] sm:$0xff] %v91
  // Predicated region
  $region14: #{_mse_pallas.1} parent=0 // pred_check
    _
  $region15: #{_mse_pallas.1} parent=0 // pred_check_branch
    %94 = sbr.rel (0) target = $region17
  $region16: #{_mse_pallas.1} parent=0 // pred_region
    _
  $region17: #{_mse_pallas.1} parent=0 // pred_fallthru
    _
  // Predicated region
  $region18: #{_mse_pallas.1} parent=0 // pred_check
    _
  $region19: #{_mse_pallas.1} parent=0 // pred_check_branch
    %96 = sbr.rel (0) target = $region21
  $region20: #{_mse_pallas.1} parent=0 // pred_region
    _
  $region21: #{_mse_pallas.1} parent=0 // pred_fallthru
    _

</llo_original>
